<compile_context>
chip_gen: v6e
topology: v6e:2x2x1
jax: 0.10.0
libtpu: 0.0.40
codegen_flags: <defaults>
</compile_context>

<pallas_src>
import functools
import numpy as np
import jax
import jax.numpy as jnp
from jax.experimental import pallas as pl
from jax.experimental.pallas import tpu as pltpu


# -----------------------------------------------------------------------------
# Fused Pallas kernel: entire eval-mode MeanModel forward
# -----------------------------------------------------------------------------
def mean_model_kernel(feat_ref, m1f_ref, m1b_ref, m2_ref,
                      wa1_ref, ba1_ref, we1_ref, be1_ref,
                      wa2_ref, ba2_ref, we2_ref, be2_ref,
                      o2_ref, o1_ref):
    """o2 = enc2(node_list), o1 = enc1(node_list); all intermediates stay in
    VMEM/vregs.  BN(eval)+bias are pre-folded into W'/b' and mask rows arrive
    pre-normalized, so each stage is tanh(x @ W' + b') around a bf16 MXU
    matmul with f32 accumulation."""
    f32 = jnp.float32
    bf16 = jnp.bfloat16

    # agg1.fc on raw node features:                     s1 = (N, H)
    s1 = jnp.tanh(jnp.dot(feat_ref[...], wa1_ref[...],
                          preferred_element_type=f32) + ba1_ref[...])
    s1 = s1.astype(bf16)

    # enc1 on the 2-hop frontier (feature fn for agg2): e1f = (Nf, H)
    a1f = jnp.dot(m1f_ref[...], s1, preferred_element_type=f32)
    e1f = jnp.tanh(jnp.dot(a1f.astype(bf16), we1_ref[...],
                           preferred_element_type=f32) + be1_ref[...])
    e1f = e1f.astype(bf16)

    # enc1(node_list) — right half of the concatenated output: e1b = (B, H)
    a1b = jnp.dot(m1b_ref[...], s1, preferred_element_type=f32)
    e1b = jnp.tanh(jnp.dot(a1b.astype(bf16), we1_ref[...],
                           preferred_element_type=f32) + be1_ref[...])

    # agg2.fc on enc1(frontier):                        s2 = (Nf, H)
    s2 = jnp.tanh(jnp.dot(e1f, wa2_ref[...],
                          preferred_element_type=f32) + ba2_ref[...])
    s2 = s2.astype(bf16)

    # enc2(node_list):                                  e2b = (B, E)
    a2 = jnp.dot(m2_ref[...], s2, preferred_element_type=f32)
    e2b = jnp.tanh(jnp.dot(a2.astype(bf16), we2_ref[...],
                           preferred_element_type=f32) + be2_ref[...])

    o2_ref[...] = e2b.astype(o2_ref.dtype)
    o1_ref[...] = e1b.astype(o1_ref.dtype)


def mean_model_pallas(features, m1f, m1b, m2,
                      wa1, ba1, we1, be1, wa2, ba2, we2, be2):
    batch = m2.shape[0]
    hidden = we1.shape[1]
    emb_dim = we2.shape[1]

    bf16 = jnp.bfloat16
    # bf16 MXU operands; biases stay f32; accumulation forced to f32 inside.
    feats_bf = features.astype(bf16)
    m1f_bf = m1f.astype(bf16)
    m1b_bf = m1b.astype(bf16)
    m2_bf = m2.astype(bf16)
    wa1_bf = wa1.astype(bf16)
    we1_bf = we1.astype(bf16)
    wa2_bf = wa2.astype(bf16)
    we2_bf = we2.astype(bf16)

    def spec(shape):
        nd = len(shape)
        return pl.BlockSpec(shape, lambda i, _nd=nd: (0,) * _nd)

    args = (feats_bf, m1f_bf, m1b_bf, m2_bf,
            wa1_bf, ba1, we1_bf, be1, wa2_bf, ba2, we2_bf, be2)
    e2_b, e1_b = pl.pallas_call(
        mean_model_kernel,
        out_shape=(jax.ShapeDtypeStruct((batch, emb_dim), jnp.float32),
                   jax.ShapeDtypeStruct((batch, hidden), jnp.float32)),
        grid=(1,),
        in_specs=[spec(a.shape) for a in args],
        out_specs=(spec((batch, emb_dim)), spec((batch, hidden))),
        compiler_params=pltpu.CompilerParams(dimension_semantics=("arbitrary",)),
    )(*args)

    # torch.cat((enc2(nodes), enc1(nodes)), dim=1) — pure data movement, done
    # in the wrapper (no in-kernel MXU identity projections).
    return jnp.concatenate([e2_b, e1_b], axis=1)


# -----------------------------------------------------------------------------
# Host-side glue: graph construction, neighbor sampling, parameter setup
# -----------------------------------------------------------------------------
def build_graph(n_nodes):
    g = {i: set() for i in range(n_nodes)}
    for i in range(n_nodes):
        for d in (1, 2, 5):
            j = (i + d) % n_nodes
            g[i].add(j)
            g[j].add(i)
    return g


def sample_neighbors(rng, node_list, g, n_nbr_samples):
    """MeanAggregator sampling: per node, n_nbr_samples neighbors w/o
    replacement (or all neighbors if fewer) plus the node itself."""
    samples = []
    for node in node_list:
        nbrs = sorted(g[node])
        if len(nbrs) >= n_nbr_samples:
            chosen = [int(c) for c in rng.choice(nbrs, n_nbr_samples,
                                                 replace=False)] + [int(node)]
        else:
            chosen = [int(c) for c in nbrs] + [int(node)]
        samples.append(chosen)
    return samples


def build_mask(samples, col_of, n_cols):
    """mask[row, col_of[sampled node]] = 1, rows normalized exactly on host."""
    mask = np.zeros((len(samples), n_cols), dtype=np.float32)
    for r, chosen in enumerate(samples):
        for c in chosen:
            mask[r, col_of[c]] = 1.0
        mask[r] /= mask[r].sum()
    return mask


def xavier_uniform(key, fan_in, fan_out):
    limit = float(np.sqrt(6.0 / (fan_in + fan_out)))
    # stored as (in, out) so the kernel computes x @ W  (== x @ weight.T in torch)
    return jax.random.uniform(key, (fan_in, fan_out), jnp.float32, -limit, limit)


def linear_bias(key, fan_in, fan_out):
    bound = float(1.0 / np.sqrt(fan_in))
    return jax.random.uniform(key, (1, fan_out), jnp.float32, -bound, bound)


def fold_bn_eval(w, b, eps=1e-5):
    """Fold BatchNorm1d (eval, default running stats mean=0, var=1, gamma=1,
    beta=0) into the preceding Linear:
        ((xW + b) - 0) / sqrt(1 + eps) * 1 + 0  ==  x (W*s) + b*s,  s = 1/sqrt(1+eps)
    """
    s = 1.0 / float(np.sqrt(1.0 + eps))
    return w * s, b * s


# -----------------------------------------------------------------------------
if __name__ == "__main__":
    # small, module-consistent sizes
    N_TOTAL = 32      # number of graph nodes (rows of `features`)
    F = 32            # feature_dim = features.size()[1]
    H = 32            # hidden_dim
    E = 16            # emb_dim
    N_NBR1, N_NBR2 = 3, 2
    BATCH = 8         # len(node_list)

    g = build_graph(N_TOTAL)
    node_list = list(range(0, 2 * BATCH, 2))
    sample_rng = np.random.default_rng(0)

    key = jax.random.PRNGKey(0)
    keys = jax.random.split(key, 16)
    features = jax.random.normal(keys[0], (N_TOTAL, F), jnp.float32)

    # --- agg2 sampling (enc2(node_list)); its unique nodes = 2-hop frontier.
    #     enc1 is only evaluated on the frontier, matching the module. -------
    samples2 = sample_neighbors(sample_rng, node_list, g, N_NBR2)
    frontier = sorted(set().union(*(set(s) for s in samples2)))
    col_of_frontier = {n: i for i, n in enumerate(frontier)}
    m2 = build_mask(samples2, col_of_frontier, len(frontier))       # (B, Nf)

    # --- agg1 sampling for enc1(frontier) (feature fn of agg2) — fresh draw.
    ident = {n: n for n in range(N_TOTAL)}
    samples1f = sample_neighbors(sample_rng, frontier, g, N_NBR1)
    m1f = build_mask(samples1f, ident, N_TOTAL)                     # (Nf, N)

    # --- agg1 sampling for enc1(node_list) — independent draw, per module.
    samples1b = sample_neighbors(sample_rng, node_list, g, N_NBR1)
    m1b = build_mask(samples1b, ident, N_TOTAL)                     # (B, N)

    # --- parameters with BN(eval) + bias pre-folded into W'/b' -------------
    wa1, ba1 = fold_bn_eval(xavier_uniform(keys[1], F, H), linear_bias(keys[2], F, H))   # agg1.fc
    we1, be1 = fold_bn_eval(xavier_uniform(keys[3], H, H), linear_bias(keys[4], H, H))   # enc1.fc
    wa2, ba2 = fold_bn_eval(xavier_uniform(keys[5], H, H), linear_bias(keys[6], H, H))   # agg2.fc
    we2, be2 = fold_bn_eval(xavier_uniform(keys[7], H, E), linear_bias(keys[8], H, E))   # enc2.fc

    out = mean_model_pallas(features,
                            jnp.asarray(m1f), jnp.asarray(m1b), jnp.asarray(m2),
                            wa1, ba1, we1, be1, wa2, ba2, we2, be2)
    out = jax.block_until_ready(out)

    assert out.shape == (BATCH, E + H), out.shape
    assert bool(jnp.all(jnp.isfinite(out)))
    print("KERNEL_OK")
</pallas_src>

<mosaic_0001>
module attributes {stable_mosaic.version = 11 : i64} {
  func.func @mean_model_kernel(%arg0: i32, %arg1: memref<32x32xbf16, #tpu.memory_space<vmem>>, %arg2: memref<20x32xbf16, #tpu.memory_space<vmem>>, %arg3: memref<8x32xbf16, #tpu.memory_space<vmem>>, %arg4: memref<8x20xbf16, #tpu.memory_space<vmem>>, %arg5: memref<32x32xbf16, #tpu.memory_space<vmem>>, %arg6: memref<1x32xf32, #tpu.memory_space<vmem>>, %arg7: memref<32x32xbf16, #tpu.memory_space<vmem>>, %arg8: memref<1x32xf32, #tpu.memory_space<vmem>>, %arg9: memref<32x32xbf16, #tpu.memory_space<vmem>>, %arg10: memref<1x32xf32, #tpu.memory_space<vmem>>, %arg11: memref<32x16xbf16, #tpu.memory_space<vmem>>, %arg12: memref<1x16xf32, #tpu.memory_space<vmem>>, %arg13: memref<8x16xf32, #tpu.memory_space<vmem>>, %arg14: memref<8x32xf32, #tpu.memory_space<vmem>>) attributes {dimension_semantics = [#tpu.dimension_semantics<arbitrary>], iteration_bounds = array<i64: 1>, scalar_prefetch = 0 : i64, scratch_operands = 0 : i64, tpu.core_type = #tpu.core_type<tc>, window_params = [{pipeline_mode = #tpu.pipeline_mode<synchronous>, transform_indices = @transform_0, window_bounds = array<i64: 32, 32>}, {pipeline_mode = #tpu.pipeline_mode<synchronous>, transform_indices = @transform_1, window_bounds = array<i64: 20, 32>}, {pipeline_mode = #tpu.pipeline_mode<synchronous>, transform_indices = @transform_2, window_bounds = array<i64: 8, 32>}, {pipeline_mode = #tpu.pipeline_mode<synchronous>, transform_indices = @transform_3, window_bounds = array<i64: 8, 20>}, {pipeline_mode = #tpu.pipeline_mode<synchronous>, transform_indices = @transform_4, window_bounds = array<i64: 32, 32>}, {pipeline_mode = #tpu.pipeline_mode<synchronous>, transform_indices = @transform_5, window_bounds = array<i64: 1, 32>}, {pipeline_mode = #tpu.pipeline_mode<synchronous>, transform_indices = @transform_6, window_bounds = array<i64: 32, 32>}, {pipeline_mode = #tpu.pipeline_mode<synchronous>, transform_indices = @transform_7, window_bounds = array<i64: 1, 32>}, {pipeline_mode = #tpu.pipeline_mode<synchronous>, transform_indices = @transform_8, window_bounds = array<i64: 32, 32>}, {pipeline_mode = #tpu.pipeline_mode<synchronous>, transform_indices = @transform_9, window_bounds = array<i64: 1, 32>}, {pipeline_mode = #tpu.pipeline_mode<synchronous>, transform_indices = @transform_10, window_bounds = array<i64: 32, 16>}, {pipeline_mode = #tpu.pipeline_mode<synchronous>, transform_indices = @transform_11, window_bounds = array<i64: 1, 16>}, {pipeline_mode = #tpu.pipeline_mode<synchronous>, transform_indices = @transform_12, window_bounds = array<i64: 8, 16>}, {pipeline_mode = #tpu.pipeline_mode<synchronous>, transform_indices = @transform_13, window_bounds = array<i64: 8, 32>}]} {
    %c0 = arith.constant 0 : index
    %c0_0 = arith.constant 0 : index
    %0 = vector.load %arg1[%c0, %c0_0] : memref<32x32xbf16, #tpu.memory_space<vmem>>, vector<32x32xbf16>
    %c0_1 = arith.constant 0 : index
    %c0_2 = arith.constant 0 : index
    %1 = vector.load %arg5[%c0_1, %c0_2] : memref<32x32xbf16, #tpu.memory_space<vmem>>, vector<32x32xbf16>
    %cst = arith.constant dense<0.000000e+00> : vector<32x32xf32>
    %2 = tpu.matmul %0, %1, %cst {dimension_numbers = #tpu.dot_dimension_numbers<[1], [0], [0], [1], [0, 0, 1, 1], [], []>} : vector<32x32xbf16>, vector<32x32xbf16>, vector<32x32xf32> -> vector<32x32xf32>
    %c0_3 = arith.constant 0 : index
    %c0_4 = arith.constant 0 : index
    %3 = vector.load %arg6[%c0_3, %c0_4] : memref<1x32xf32, #tpu.memory_space<vmem>>, vector<1x32xf32>
    %4 = vector.broadcast %3 : vector<1x32xf32> to vector<32x32xf32>
    %5 = arith.addf %2, %4 : vector<32x32xf32>
    %6 = math.tanh %5 : vector<32x32xf32>
    %7 = arith.truncf %6 : vector<32x32xf32> to vector<32x32xbf16>
    %c0_5 = arith.constant 0 : index
    %c0_6 = arith.constant 0 : index
    %8 = vector.load %arg2[%c0_5, %c0_6] : memref<20x32xbf16, #tpu.memory_space<vmem>>, vector<20x32xbf16>
    %cst_7 = arith.constant dense<0.000000e+00> : vector<20x32xf32>
    %9 = tpu.matmul %8, %7, %cst_7 {dimension_numbers = #tpu.dot_dimension_numbers<[1], [0], [0], [1], [0, 0, 1, 1], [], []>} : vector<20x32xbf16>, vector<32x32xbf16>, vector<20x32xf32> -> vector<20x32xf32>
    %10 = arith.truncf %9 : vector<20x32xf32> to vector<20x32xbf16>
    %c0_8 = arith.constant 0 : index
    %c0_9 = arith.constant 0 : index
    %11 = vector.load %arg7[%c0_8, %c0_9] : memref<32x32xbf16, #tpu.memory_space<vmem>>, vector<32x32xbf16>
    %cst_10 = arith.constant dense<0.000000e+00> : vector<20x32xf32>
    %12 = tpu.matmul %10, %11, %cst_10 {dimension_numbers = #tpu.dot_dimension_numbers<[1], [0], [0], [1], [0, 0, 1, 1], [], []>} : vector<20x32xbf16>, vector<32x32xbf16>, vector<20x32xf32> -> vector<20x32xf32>
    %c0_11 = arith.constant 0 : index
    %c0_12 = arith.constant 0 : index
    %13 = vector.load %arg8[%c0_11, %c0_12] : memref<1x32xf32, #tpu.memory_space<vmem>>, vector<1x32xf32>
    %14 = vector.broadcast %13 : vector<1x32xf32> to vector<20x32xf32>
    %15 = arith.addf %12, %14 : vector<20x32xf32>
    %16 = math.tanh %15 : vector<20x32xf32>
    %17 = arith.truncf %16 : vector<20x32xf32> to vector<20x32xbf16>
    %c0_13 = arith.constant 0 : index
    %c0_14 = arith.constant 0 : index
    %18 = vector.load %arg3[%c0_13, %c0_14] : memref<8x32xbf16, #tpu.memory_space<vmem>>, vector<8x32xbf16>
    %cst_15 = arith.constant dense<0.000000e+00> : vector<8x32xf32>
    %19 = tpu.matmul %18, %7, %cst_15 {dimension_numbers = #tpu.dot_dimension_numbers<[1], [0], [0], [1], [0, 0, 1, 1], [], []>} : vector<8x32xbf16>, vector<32x32xbf16>, vector<8x32xf32> -> vector<8x32xf32>
    %20 = arith.truncf %19 : vector<8x32xf32> to vector<8x32xbf16>
    %c0_16 = arith.constant 0 : index
    %c0_17 = arith.constant 0 : index
    %21 = vector.load %arg7[%c0_16, %c0_17] : memref<32x32xbf16, #tpu.memory_space<vmem>>, vector<32x32xbf16>
    %cst_18 = arith.constant dense<0.000000e+00> : vector<8x32xf32>
    %22 = tpu.matmul %20, %21, %cst_18 {dimension_numbers = #tpu.dot_dimension_numbers<[1], [0], [0], [1], [0, 0, 1, 1], [], []>} : vector<8x32xbf16>, vector<32x32xbf16>, vector<8x32xf32> -> vector<8x32xf32>
    %c0_19 = arith.constant 0 : index
    %c0_20 = arith.constant 0 : index
    %23 = vector.load %arg8[%c0_19, %c0_20] : memref<1x32xf32, #tpu.memory_space<vmem>>, vector<1x32xf32>
    %24 = vector.broadcast %23 : vector<1x32xf32> to vector<8x32xf32>
    %25 = arith.addf %22, %24 : vector<8x32xf32>
    %26 = math.tanh %25 : vector<8x32xf32>
    %c0_21 = arith.constant 0 : index
    %c0_22 = arith.constant 0 : index
    %27 = vector.load %arg9[%c0_21, %c0_22] : memref<32x32xbf16, #tpu.memory_space<vmem>>, vector<32x32xbf16>
    %cst_23 = arith.constant dense<0.000000e+00> : vector<20x32xf32>
    %28 = tpu.matmul %17, %27, %cst_23 {dimension_numbers = #tpu.dot_dimension_numbers<[1], [0], [0], [1], [0, 0, 1, 1], [], []>} : vector<20x32xbf16>, vector<32x32xbf16>, vector<20x32xf32> -> vector<20x32xf32>
    %c0_24 = arith.constant 0 : index
    %c0_25 = arith.constant 0 : index
    %29 = vector.load %arg10[%c0_24, %c0_25] : memref<1x32xf32, #tpu.memory_space<vmem>>, vector<1x32xf32>
    %30 = vector.broadcast %29 : vector<1x32xf32> to vector<20x32xf32>
    %31 = arith.addf %28, %30 : vector<20x32xf32>
    %32 = math.tanh %31 : vector<20x32xf32>
    %33 = arith.truncf %32 : vector<20x32xf32> to vector<20x32xbf16>
    %c0_26 = arith.constant 0 : index
    %c0_27 = arith.constant 0 : index
    %34 = vector.load %arg4[%c0_26, %c0_27] : memref<8x20xbf16, #tpu.memory_space<vmem>>, vector<8x20xbf16>
    %cst_28 = arith.constant dense<0.000000e+00> : vector<8x32xf32>
    %35 = tpu.matmul %34, %33, %cst_28 {dimension_numbers = #tpu.dot_dimension_numbers<[1], [0], [0], [1], [0, 0, 1, 1], [], []>} : vector<8x20xbf16>, vector<20x32xbf16>, vector<8x32xf32> -> vector<8x32xf32>
    %36 = arith.truncf %35 : vector<8x32xf32> to vector<8x32xbf16>
    %c0_29 = arith.constant 0 : index
    %c0_30 = arith.constant 0 : index
    %37 = vector.load %arg11[%c0_29, %c0_30] : memref<32x16xbf16, #tpu.memory_space<vmem>>, vector<32x16xbf16>
    %cst_31 = arith.constant dense<0.000000e+00> : vector<8x16xf32>
    %38 = tpu.matmul %36, %37, %cst_31 {dimension_numbers = #tpu.dot_dimension_numbers<[1], [0], [0], [1], [0, 0, 1, 1], [], []>} : vector<8x32xbf16>, vector<32x16xbf16>, vector<8x16xf32> -> vector<8x16xf32>
    %c0_32 = arith.constant 0 : index
    %c0_33 = arith.constant 0 : index
    %39 = vector.load %arg12[%c0_32, %c0_33] : memref<1x16xf32, #tpu.memory_space<vmem>>, vector<1x16xf32>
    %40 = vector.broadcast %39 : vector<1x16xf32> to vector<8x16xf32>
    %41 = arith.addf %38, %40 : vector<8x16xf32>
    %42 = math.tanh %41 : vector<8x16xf32>
    %c0_34 = arith.constant 0 : index
    %c0_35 = arith.constant 0 : index
    %43 = vector.load %arg13[%c0_34, %c0_35] : memref<8x16xf32, #tpu.memory_space<vmem>>, vector<8x16xf32>
    tpu.vector_store %arg13[%c0_34, %c0_35], %42 {strides = array<i32>} : memref<8x16xf32, #tpu.memory_space<vmem>>, vector<8x16xf32>,
    %c0_36 = arith.constant 0 : index
    %c0_37 = arith.constant 0 : index
    %44 = vector.load %arg14[%c0_36, %c0_37] : memref<8x32xf32, #tpu.memory_space<vmem>>, vector<8x32xf32>
    tpu.vector_store %arg14[%c0_36, %c0_37], %26 {strides = array<i32>} : memref<8x32xf32, #tpu.memory_space<vmem>>, vector<8x32xf32>,
    return
  }
  func.func @transform_0(%arg0: i32) -> (i32, i32) {
    %c0_i32 = arith.constant 0 : i32
    %c0_i32_0 = arith.constant 0 : i32
    %c0_i32_1 = arith.constant 0 : i32
    return %c0_i32, %c0_i32_0 : i32, i32
  }
  func.func @transform_1(%arg0: i32) -> (i32, i32) {
    %c0_i32 = arith.constant 0 : i32
    %c0_i32_0 = arith.constant 0 : i32
    %c0_i32_1 = arith.constant 0 : i32
    return %c0_i32, %c0_i32_0 : i32, i32
  }
  func.func @transform_2(%arg0: i32) -> (i32, i32) {
    %c0_i32 = arith.constant 0 : i32
    %c0_i32_0 = arith.constant 0 : i32
    %c0_i32_1 = arith.constant 0 : i32
    return %c0_i32, %c0_i32_0 : i32, i32
  }
  func.func @transform_3(%arg0: i32) -> (i32, i32) {
    %c0_i32 = arith.constant 0 : i32
    %c0_i32_0 = arith.constant 0 : i32
    %c0_i32_1 = arith.constant 0 : i32
    return %c0_i32, %c0_i32_0 : i32, i32
  }
  func.func @transform_4(%arg0: i32) -> (i32, i32) {
    %c0_i32 = arith.constant 0 : i32
    %c0_i32_0 = arith.constant 0 : i32
    %c0_i32_1 = arith.constant 0 : i32
    return %c0_i32, %c0_i32_0 : i32, i32
  }
  func.func @transform_5(%arg0: i32) -> (i32, i32) {
    %c0_i32 = arith.constant 0 : i32
    %c0_i32_0 = arith.constant 0 : i32
    %c0_i32_1 = arith.constant 0 : i32
    return %c0_i32, %c0_i32_0 : i32, i32
  }
  func.func @transform_6(%arg0: i32) -> (i32, i32) {
    %c0_i32 = arith.constant 0 : i32
    %c0_i32_0 = arith.constant 0 : i32
    %c0_i32_1 = arith.constant 0 : i32
    return %c0_i32, %c0_i32_0 : i32, i32
  }
  func.func @transform_7(%arg0: i32) -> (i32, i32) {
    %c0_i32 = arith.constant 0 : i32
    %c0_i32_0 = arith.constant 0 : i32
    %c0_i32_1 = arith.constant 0 : i32
    return %c0_i32, %c0_i32_0 : i32, i32
  }
  func.func @transform_8(%arg0: i32) -> (i32, i32) {
    %c0_i32 = arith.constant 0 : i32
    %c0_i32_0 = arith.constant 0 : i32
    %c0_i32_1 = arith.constant 0 : i32
    return %c0_i32, %c0_i32_0 : i32, i32
  }
  func.func @transform_9(%arg0: i32) -> (i32, i32) {
    %c0_i32 = arith.constant 0 : i32
    %c0_i32_0 = arith.constant 0 : i32
    %c0_i32_1 = arith.constant 0 : i32
    return %c0_i32, %c0_i32_0 : i32, i32
  }
  func.func @transform_10(%arg0: i32) -> (i32, i32) {
    %c0_i32 = arith.constant 0 : i32
    %c0_i32_0 = arith.constant 0 : i32
    %c0_i32_1 = arith.constant 0 : i32
    return %c0_i32, %c0_i32_0 : i32, i32
  }
  func.func @transform_11(%arg0: i32) -> (i32, i32) {
    %c0_i32 = arith.constant 0 : i32
    %c0_i32_0 = arith.constant 0 : i32
    %c0_i32_1 = arith.constant 0 : i32
    return %c0_i32, %c0_i32_0 : i32, i32
  }
  func.func @transform_12(%arg0: i32) -> (i32, i32) {
    %c0_i32 = arith.constant 0 : i32
    %c0_i32_0 = arith.constant 0 : i32
    %c0_i32_1 = arith.constant 0 : i32
    return %c0_i32, %c0_i32_0 : i32, i32
  }
  func.func @transform_13(%arg0: i32) -> (i32, i32) {
    %c0_i32 = arith.constant 0 : i32
    %c0_i32_0 = arith.constant 0 : i32
    %c0_i32_1 = arith.constant 0 : i32
    return %c0_i32, %c0_i32_0 : i32, i32
  }
}

</mosaic_0001>

<llo_original>
// kernel: tpu_custom_call.1
$region0: #{tpu_custom_call.1}
  #allocation0 [shape = 'u32[]', space=smem, size = 0x4, offset = 0x4, fixed_abs, tag = 'smem constant byte address 0x4 - core index']
  #allocation1 [shape = 'u32[144,128]{1,0:T(1,128)}', space=vmem, size = 0x12000, scoped, tag = 'internal scratch']
  %s0 = inlined_call_operand.vmem [shape: bf16[32,32], index: 0, kind: input, shape index: {}]
  %s1 = inlined_call_operand.hbm [shape: bf16[20,32], index: 1, kind: input, shape index: {}]
  %s2 = inlined_call_operand.hbm [shape: bf16[8,32], index: 2, kind: input, shape index: {}]
  %s3 = inlined_call_operand.hbm [shape: bf16[8,20], index: 3, kind: input, shape index: {}]
  %s4 = inlined_call_operand.hbm [shape: bf16[32,32], index: 4, kind: input, shape index: {}]
  %s5 = inlined_call_operand.hbm [shape: f32[1,32], index: 5, kind: input, shape index: {}]
  %s6 = inlined_call_operand.vmem [shape: bf16[32,32], index: 6, kind: input, shape index: {}]
  %s7 = inlined_call_operand.hbm [shape: f32[1,32], index: 7, kind: input, shape index: {}]
  %s8 = inlined_call_operand.hbm [shape: bf16[32,32], index: 8, kind: input, shape index: {}]
  %s9 = inlined_call_operand.hbm [shape: f32[1,32], index: 9, kind: input, shape index: {}]
  %s10 = inlined_call_operand.vmem [shape: bf16[32,16], index: 10, kind: input, shape index: {}]
  %s11 = inlined_call_operand.vmem [shape: f32[1,16], index: 11, kind: input, shape index: {}]
  %s12 = inlined_call_operand.hbm [shape: f32[8,16], index: 12, kind: output, shape index: {0}]
  %s13 = inlined_call_operand.hbm [shape: f32[8,32], index: 13, kind: output, shape index: {1}]
  %14 = xla_tuple %s12, %s13
  %s15 = sld [smem:[#allocation0]]
  $region98: #{tpu_custom_call.1} parent=0
    _
  %s17 = ssub.s32 1, %s15
  %s18 = scalar_select 0, %s17, %s15
  $region1: #{tpu_custom_call.1} parent=0
    #allocation2 [shape = 'u8[6144]{0}', space=vmem, size = 0x1800, scoped, tag = 'input window, operand 1, single buffered']
    #allocation3 [shape = 's32[1]{0}', space=sflag, size = 0x4, scoped, tag = 'scoped memory for tpu_custom_call.1']
    #allocation4 [shape = 's32[1]{0}', space=sflag, size = 0x4, scoped, tag = 'scoped memory for tpu_custom_call.1']
    #allocation5 [shape = 'u8[2048]{0}', space=vmem, size = 0x800, scoped, tag = 'input window, operand 2, single buffered']
    #allocation6 [shape = 's32[1]{0}', space=sflag, size = 0x4, scoped, tag = 'scoped memory for tpu_custom_call.1']
    #allocation7 [shape = 'u8[2048]{0}', space=vmem, size = 0x800, scoped, tag = 'input window, operand 3, single buffered']
    #allocation8 [shape = 'u8[8192]{0}', space=vmem, size = 0x2000, scoped, tag = 'input window, operand 4, single buffered']
    #allocation9 [shape = 's32[1]{0}', space=sflag, size = 0x4, scoped, tag = 'scoped memory for tpu_custom_call.1']
    #allocation10 [shape = 'u8[512]{0}', space=vmem, size = 0x400, scoped, tag = 'input window, operand 5, single buffered']
    #allocation11 [shape = 'u8[512]{0}', space=vmem, size = 0x400, scoped, tag = 'input window, operand 7, single buffered']
    #allocation12 [shape = 's32[1]{0}', space=sflag, size = 0x4, scoped, tag = 'scoped memory for tpu_custom_call.1']
    #allocation13 [shape = 'u8[8192]{0}', space=vmem, size = 0x2000, scoped, tag = 'input window, operand 8, single buffered']
    #allocation14 [shape = 'u8[512]{0}', space=vmem, size = 0x400, scoped, tag = 'input window, operand 9, single buffered']
    #allocation15 [shape = 's32[1]{0}', space=sflag, size = 0x4, scoped, tag = 'scoped memory for tpu_custom_call.1']
    #allocation16 [shape = 'u8[4096]{0}', space=vmem, size = 0x1000, scoped, tag = 'output window, operand 0, single buffered']
    #allocation17 [shape = 'u8[4096]{0}', space=vmem, size = 0x1000, scoped, tag = 'output window, operand 1, single buffered']
    #allocation18 [shape = 's32[1]{0}', space=sflag, size = 0x4, scoped, tag = 'scoped memory for tpu_custom_call.1']
    %19 = vsyncpa [#allocation3], 0
    %20 = vsyncpa [#allocation6], 0
    %21 = vsyncpa [#allocation9], 0
    %22 = vsyncpa [#allocation12], 0
    %23 = vsyncpa [#allocation15], 0
    %24 = vsyncpa [#allocation4], 0
    %25 = vsyncpa [#allocation18], 0
    // Predicated region
    $region2: #{tpu_custom_call.1} parent=1 // pred_check
      _
    $region3: #{tpu_custom_call.1} parent=1 // pred_check_branch
      %27 = sbr.rel (0) target = $region5
    $region4: #{tpu_custom_call.1} parent=1 // pred_region
      _
    $region5: #{tpu_custom_call.1} parent=1 // pred_fallthru
      _
    // Predicated region
    $region6: #{tpu_custom_call.1} parent=1 // pred_check
      _
    $region7: #{tpu_custom_call.1} parent=1 // pred_check_branch
      %29 = sbr.rel (0) target = $region9
    $region8: #{tpu_custom_call.1} parent=1 // pred_region
      %s31 = ssub.s32 192, 192
      %32 = vsyncadd [#allocation3], %s31
      %s33 = sshll.u32 [#allocation2], 4
      %s34 = int_to_ptr.vmem [resolvable:$true] %s33
      %39 = dma.hbm_to_vmem [thread:$0]  %s1, 192, %s34, [#allocation3], 64, 64, 4
    $region9: #{tpu_custom_call.1} parent=1 // pred_fallthru
      _
    // Predicated region
    $region10: #{tpu_custom_call.1} parent=1 // pred_check
      _
    $region11: #{tpu_custom_call.1} parent=1 // pred_check_branch
      %41 = sbr.rel (0) target = $region13
    $region12: #{tpu_custom_call.1} parent=1 // pred_region
      %s43 = ssub.s32 64, 64
      %44 = vsyncadd [#allocation6], %s43
      %s46 = sshll.u32 [#allocation5], 4
      %s47 = int_to_ptr.vmem [resolvable:$true] %s46
      %49 = dma.hbm_to_vmem [thread:$0]  %s2, 64, %s47, [#allocation6]
    $region13: #{tpu_custom_call.1} parent=1 // pred_fallthru
      _
    // Predicated region
    $region14: #{tpu_custom_call.1} parent=1 // pred_check
      _
    $region15: #{tpu_custom_call.1} parent=1 // pred_check_branch
      %51 = sbr.rel (0) target = $region17
    $region16: #{tpu_custom_call.1} parent=1 // pred_region
      %s53 = ssub.s32 64, 64
      %54 = vsyncadd [#allocation6], %s53
      %s56 = sshll.u32 [#allocation7], 4
      %s57 = int_to_ptr.vmem [resolvable:$true] %s56
      %59 = dma.hbm_to_vmem [thread:$0]  %s3, 64, %s57, [#allocation6]
    $region17: #{tpu_custom_call.1} parent=1 // pred_fallthru
      _
    // Predicated region
    $region18: #{tpu_custom_call.1} parent=1 // pred_check
      _
    $region19: #{tpu_custom_call.1} parent=1 // pred_check_branch
      %61 = sbr.rel (0) target = $region21
    $region20: #{tpu_custom_call.1} parent=1 // pred_region
      %s63 = ssub.s32 256, 256
      %64 = vsyncadd [#allocation9], %s63
      %s65 = sshll.u32 [#allocation8], 4
      %s66 = int_to_ptr.vmem [resolvable:$true] %s65
      %71 = dma.hbm_to_vmem [thread:$0]  %s4, 256, %s66, [#allocation9], 64, 64, 4
    $region21: #{tpu_custom_call.1} parent=1 // pred_fallthru
      _
    // Predicated region
    $region22: #{tpu_custom_call.1} parent=1 // pred_check
      _
    $region23: #{tpu_custom_call.1} parent=1 // pred_check_branch
      %73 = sbr.rel (0) target = $region25
    $region24: #{tpu_custom_call.1} parent=1 // pred_region
      %s75 = ssub.s32 16, 16
      %76 = vsyncadd [#allocation9], %s75
      %s78 = sshll.u32 [#allocation10], 4
      %s79 = int_to_ptr.vmem [resolvable:$true] %s78
      %81 = dma.hbm_to_vmem [thread:$0]  %s5, 16, %s79, [#allocation9]
    $region25: #{tpu_custom_call.1} parent=1 // pred_fallthru
      _
    // Predicated region
    $region26: #{tpu_custom_call.1} parent=1 // pred_check
      _
    $region27: #{tpu_custom_call.1} parent=1 // pred_check_branch
      %83 = sbr.rel (0) target = $region29
    $region28: #{tpu_custom_call.1} parent=1 // pred_region
      _
    $region29: #{tpu_custom_call.1} parent=1 // pred_fallthru
      _
    // Predicated region
    $region30: #{tpu_custom_call.1} parent=1 // pred_check
      _
    $region31: #{tpu_custom_call.1} parent=1 // pred_check_branch
      %85 = sbr.rel (0) target = $region33
    $region32: #{tpu_custom_call.1} parent=1 // pred_region
      %s87 = ssub.s32 16, 16
      %88 = vsyncadd [#allocation12], %s87
      %s90 = sshll.u32 [#allocation11], 4
      %s91 = int_to_ptr.vmem [resolvable:$true] %s90
      %93 = dma.hbm_to_vmem [thread:$0]  %s7, 16, %s91, [#allocation12]
    $region33: #{tpu_custom_call.1} parent=1 // pred_fallthru
      _
    // Predicated region
    $region34: #{tpu_custom_call.1} parent=1 // pred_check
      _
    $region35: #{tpu_custom_call.1} parent=1 // pred_check_branch
      %95 = sbr.rel (0) target = $region37
    $region36: #{tpu_custom_call.1} parent=1 // pred_region
      %s97 = ssub.s32 256, 256
      %98 = vsyncadd [#allocation12], %s97
      %s99 = sshll.u32 [#allocation13], 4
      %s100 = int_to_ptr.vmem [resolvable:$true] %s99
      %105 = dma.hbm_to_vmem [thread:$0]  %s8, 256, %s100, [#allocation12], 64, 64, 4
    $region37: #{tpu_custom_call.1} parent=1 // pred_fallthru
      _
    // Predicated region
    $region38: #{tpu_custom_call.1} parent=1 // pred_check
      _
    $region39: #{tpu_custom_call.1} parent=1 // pred_check_branch
      %107 = sbr.rel (0) target = $region41
    $region40: #{tpu_custom_call.1} parent=1 // pred_region
      %s109 = ssub.s32 16, 16
      %110 = vsyncadd [#allocation15], %s109
      %s112 = sshll.u32 [#allocation14], 4
      %s113 = int_to_ptr.vmem [resolvable:$true] %s112
      %115 = dma.hbm_to_vmem [thread:$0]  %s9, 16, %s113, [#allocation15]
    $region41: #{tpu_custom_call.1} parent=1 // pred_fallthru
      _
    // Predicated region
    $region42: #{tpu_custom_call.1} parent=1 // pred_check
      _
    $region43: #{tpu_custom_call.1} parent=1 // pred_check_branch
      %117 = sbr.rel (0) target = $region45
    $region44: #{tpu_custom_call.1} parent=1 // pred_region
      _
    $region45: #{tpu_custom_call.1} parent=1 // pred_fallthru
      _
    // Predicated region
    $region46: #{tpu_custom_call.1} parent=1 // pred_check
      _
    $region47: #{tpu_custom_call.1} parent=1 // pred_check_branch
      %119 = sbr.rel (0) target = $region49
    $region48: #{tpu_custom_call.1} parent=1 // pred_region
      _
    $region49: #{tpu_custom_call.1} parent=1 // pred_fallthru
      _
    // Predicated region
    $region50: #{tpu_custom_call.1} parent=1 // pred_check
      _
    $region51: #{tpu_custom_call.1} parent=1 // pred_check_branch
      %121 = sbr.rel (0) target = $region53
    $region52: #{tpu_custom_call.1} parent=1 // pred_region
      %122 = dma.done [#allocation3], 192
    $region53: #{tpu_custom_call.1} parent=1 // pred_fallthru
      _
    // Predicated region
    $region54: #{tpu_custom_call.1} parent=1 // pred_check
      _
    $region55: #{tpu_custom_call.1} parent=1 // pred_check_branch
      %124 = sbr.rel (0) target = $region57
    $region56: #{tpu_custom_call.1} parent=1 // pred_region
      %125 = dma.done [#allocation6], 64
    $region57: #{tpu_custom_call.1} parent=1 // pred_fallthru
      _
    // Predicated region
    $region58: #{tpu_custom_call.1} parent=1 // pred_check
      _
    $region59: #{tpu_custom_call.1} parent=1 // pred_check_branch
      %127 = sbr.rel (0) target = $region61
    $region60: #{tpu_custom_call.1} parent=1 // pred_region
      %128 = dma.done [#allocation6], 64
    $region61: #{tpu_custom_call.1} parent=1 // pred_fallthru
      _
    // Predicated region
    $region62: #{tpu_custom_call.1} parent=1 // pred_check
      _
    $region63: #{tpu_custom_call.1} parent=1 // pred_check_branch
      %130 = sbr.rel (0) target = $region65
    $region64: #{tpu_custom_call.1} parent=1 // pred_region
      %131 = dma.done [#allocation9], 256
    $region65: #{tpu_custom_call.1} parent=1 // pred_fallthru
      _
    // Predicated region
    $region66: #{tpu_custom_call.1} parent=1 // pred_check
      _
    $region67: #{tpu_custom_call.1} parent=1 // pred_check_branch
      %133 = sbr.rel (0) target = $region69
    $region68: #{tpu_custom_call.1} parent=1 // pred_region
      %134 = dma.done [#allocation9], 16
    $region69: #{tpu_custom_call.1} parent=1 // pred_fallthru
      _
    // Predicated region
    $region70: #{tpu_custom_call.1} parent=1 // pred_check
      _
    $region71: #{tpu_custom_call.1} parent=1 // pred_check_branch
      %136 = sbr.rel (0) target = $region73
    $region72: #{tpu_custom_call.1} parent=1 // pred_region
      %137 = dma.done [#allocation12], 16
    $region73: #{tpu_custom_call.1} parent=1 // pred_fallthru
      _
    // Predicated region
    $region74: #{tpu_custom_call.1} parent=1 // pred_check
      _
    $region75: #{tpu_custom_call.1} parent=1 // pred_check_branch
      %139 = sbr.rel (0) target = $region77
    $region76: #{tpu_custom_call.1} parent=1 // pred_region
      %140 = dma.done [#allocation12], 256
    $region77: #{tpu_custom_call.1} parent=1 // pred_fallthru
      _
    // Predicated region
    $region78: #{tpu_custom_call.1} parent=1 // pred_check
      _
    $region79: #{tpu_custom_call.1} parent=1 // pred_check_branch
      %142 = sbr.rel (0) target = $region81
    $region80: #{tpu_custom_call.1} parent=1 // pred_region
      %143 = dma.done [#allocation15], 16
    $region81: #{tpu_custom_call.1} parent=1 // pred_fallthru
      _
    %v145 = vld [vmem:[%s0] sm:$0xf]
    %v146 = vld [vmem:[%s0 + $0x4] sm:$0xf]
    %v147 = vld [vmem:[%s0 + $0x8] sm:$0xf]
    %v148 = vld [vmem:[%s0 + $0xc] sm:$0xf]
    %v149 = vld [vmem:[#allocation8] sm:$0xf]
    %v150 = vld [vmem:[#allocation8 + $0x4] sm:$0xf]
    %v151 = vld [vmem:[#allocation8 + $0x8] sm:$0xf]
    %v152 = vld [vmem:[#allocation8 + $0xc] sm:$0xf]
    %v153 = vld [vmem:[#allocation10] sm:$0x1]
    %v155 = vlaneseq
    %v156 = vshrl.u32 %v155, 7
    %v157 = vsub.s32 0, %v156
    %v158 = vrot.slane %v153, %v157
    %v164 = vunpack.c.l.b16 %v145
    %v165 = vunpack.c.l.b16 %v146
    %v166 = vunpack.c.l.b16 %v147
    %v167 = vunpack.c.l.b16 %v148
    %v168 = vpack.c.b16 %v165, %v164
    %v169 = vpack.c.b16 %v167, %v166
    %v174 = vunpack.c.l.b16 %v149
    %v175 = vunpack.c.l.b16 %v150
    %v176 = vunpack.c.l.b16 %v151
    %v177 = vunpack.c.l.b16 %v152
    %v178 = vpack.c.b16 %v175, %v174
    %v179 = vpack.c.b16 %v177, %v176
    %vm182 = vcmask 261120
    %v184 = vsel %vm182, %v168, 0
    %v187 = vsel %vm182, %v169, 0
    %189 = vmatprep.subr.bf16.mxu0 0
    %190 = vmatpush1.bf16.msra.mxu0 0
    %191 = vmatprep.subr.bf16.mxu0 0
    %192 = vmatpush1.bf16.msra.mxu0 0
    %193 = vmatprep.subr.bf16.mxu0 0
    %194 = vmatpush1.bf16.msra.mxu0 0
    %195 = vmatprep.subr.bf16.mxu0 0
    %196 = vmatpush1.bf16.msra.mxu0 0
    %197 = vmatprep.subr.bf16.mxu0 0
    %198 = vmatpush1.bf16.msra.mxu0 0
    %199 = vmatprep.subr.bf16.mxu0 0
    %200 = vmatpush1.bf16.msra.mxu0 0
    %201 = vmatprep.subr.bf16.mxu0 0
    %202 = vmatpush1.bf16.msra.mxu0 %v179
    %203 = vmatprep.subr.bf16.mxu0 0
    %204 = vmatpush1.bf16.msra.mxu0 %v178
    %205 = vmatprep.subr.bf16.mxu0 0
    %206 = vmatpush2.bf16.msra.mxu0 0
    %207 = vmatprep.subr.bf16.mxu0 0
    %208 = vmatpush2.bf16.msra.mxu0 0
    %209 = vmatprep.subr.bf16.mxu0 0
    %210 = vmatpush2.bf16.msra.mxu0 0
    %211 = vmatprep.subr.bf16.mxu0 0
    %212 = vmatpush2.bf16.msra.mxu0 0
    %213 = vmatprep.subr.bf16.mxu0 0
    %214 = vmatpush2.bf16.msra.mxu0 0
    %215 = vmatprep.subr.bf16.mxu0 0
    %216 = vmatpush2.bf16.msra.mxu0 0
    %217 = vmatprep.subr.bf16.mxu0 0
    %218 = vmatpush2.bf16.msra.mxu0 0
    %219 = vmatprep.subr.bf16.mxu0 0
    %220 = vmatpush2.bf16.msra.mxu0 0
    %221 = vmatprep.mubr.bf16.mxu0 0
    %222 = vmatmul.mubr.bf16.gmra.mxu0 %v184
    %v223 = vpop.f32.mrf.mxu0
    %v224 = vadd.f32 %v158, %v223
    %v225 = vpop.f32.mrf.mxu0
    %v226 = vpop.f32.mrf.mxu0
    %v227 = vadd.f32 %v158, %v226
    %v228 = vpop.f32.mrf.mxu0
    %229 = vmatprep.mubr.bf16.mxu0 0
    %230 = vmatmul.mubr.bf16.gmra.mxu0 %v187
    %v231 = vpop.f32.mrf.mxu0
    %v232 = vadd.f32 %v158, %v231
    %v233 = vpop.f32.mrf.mxu0
    %v234 = vpop.f32.mrf.mxu0
    %v235 = vadd.f32 %v158, %v234
    %v236 = vpop.f32.mrf.mxu0
    %237 = vdwg.mxu0
    %v238 = vtanh.pop %v224
    %v239 = vtanh.pop %v227
    %v240 = vtanh.pop %v232
    %v241 = vtanh.pop %v235
    %v242 = vpack.c.bf16 %v239, %v238
    %v243 = vpack.c.bf16 %v241, %v240
    %v244 = vld [vmem:[#allocation2] sm:$0xf]
    %v245 = vld [vmem:[#allocation2 + $0x4] sm:$0xf]
    %v246 = vld [vmem:[#allocation2 + $0x8] sm:$0x3]
    %v250 = vunpack.c.l.b16 %v244
    %v251 = vunpack.c.l.b16 %v245
    %v252 = vunpack.c.l.b16 %v246
    %v253 = vpack.c.b16 %v251, %v250
    %v254 = vpack.c.b16 %v252, %v252
    %v256 = vsel %vm182, %v253, 0
    %v259 = vsel %vm182, %v254, 0
    %261 = vmatprep.subr.bf16.mxu0 0
    %262 = vmatpush1.bf16.msra.mxu0 0
    %263 = vmatprep.subr.bf16.mxu0 0
    %264 = vmatpush1.bf16.msra.mxu0 0
    %265 = vmatprep.subr.bf16.mxu0 0
    %266 = vmatpush1.bf16.msra.mxu0 0
    %267 = vmatprep.subr.bf16.mxu0 0
    %268 = vmatpush1.bf16.msra.mxu0 0
    %269 = vmatprep.subr.bf16.mxu0 0
    %270 = vmatpush1.bf16.msra.mxu0 0
    %271 = vmatprep.subr.bf16.mxu0 0
    %272 = vmatpush1.bf16.msra.mxu0 0
    %273 = vmatprep.subr.bf16.mxu0 0
    %274 = vmatpush1.bf16.msra.mxu0 %v243
    %275 = vmatprep.subr.bf16.mxu0 0
    %276 = vmatpush1.bf16.msra.mxu0 %v242
    %277 = vmatprep.subr.bf16.mxu0 0
    %278 = vmatpush2.bf16.msra.mxu0 0
    %279 = vmatprep.subr.bf16.mxu0 0
    %280 = vmatpush2.bf16.msra.mxu0 0
    %281 = vmatprep.subr.bf16.mxu0 0
    %282 = vmatpush2.bf16.msra.mxu0 0
    %283 = vmatprep.subr.bf16.mxu0 0
    %284 = vmatpush2.bf16.msra.mxu0 0
    %285 = vmatprep.subr.bf16.mxu0 0
    %286 = vmatpush2.bf16.msra.mxu0 0
    %287 = vmatprep.subr.bf16.mxu0 0
    %288 = vmatpush2.bf16.msra.mxu0 0
    %289 = vmatprep.subr.bf16.mxu0 0
    %290 = vmatpush2.bf16.msra.mxu0 0
    %291 = vmatprep.subr.bf16.mxu0 0
    %292 = vmatpush2.bf16.msra.mxu0 0
    %293 = vmatprep.mubr.bf16.mxu0 0
    %294 = vmatmul.mubr.bf16.gmra.mxu0 %v256
    %v295 = vpop.f32.mrf.mxu0
    %v296 = vadd.f32 0.0, %v295
    %v297 = vpop.f32.mrf.mxu0
    %v298 = vpop.f32.mrf.mxu0
    %v299 = vadd.f32 0.0, %v298
    %v300 = vpop.f32.mrf.mxu0
    %301 = vmatprep.mubr.bf16.mxu0 0
    %302 = vmatmul.mubr.bf16.gmra.mxu0 %v259
    %v303 = vpop.f32.mrf.mxu0
    %v304 = vadd.f32 0.0, %v303
    %v305 = vpop.f32.mrf.mxu0
    %v306 = vpop.f32.mrf.mxu0
    %v307 = vpop.f32.mrf.mxu0
    %308 = vdwg.mxu0
    %v309 = vpack.c.bf16 %v299, %v296
    %v310 = vpack.c.bf16 %v304, %v304
    %v311 = vld [vmem:[%s6] sm:$0xf]
    %v312 = vld [vmem:[%s6 + $0x4] sm:$0xf]
    %v313 = vld [vmem:[%s6 + $0x8] sm:$0xf]
    %v314 = vld [vmem:[%s6 + $0xc] sm:$0xf]
    %v315 = vld [vmem:[#allocation11] sm:$0x1]
    %v317 = vlaneseq
    %v318 = vshrl.u32 %v317, 7
    %v319 = vsub.s32 0, %v318
    %v320 = vrot.slane %v315, %v319
    %v326 = vunpack.c.l.b16 %v311
    %v327 = vunpack.c.l.b16 %v312
    %v328 = vunpack.c.l.b16 %v313
    %v329 = vunpack.c.l.b16 %v314
    %v330 = vpack.c.b16 %v327, %v326
    %v331 = vpack.c.b16 %v329, %v328
    %v335 = vsel %vm182, %v309, 0
    %v338 = vsel %vm182, %v310, 0
    %340 = vmatprep.subr.bf16.mxu0 0
    %341 = vmatpush1.bf16.msra.mxu0 0
    %342 = vmatprep.subr.bf16.mxu0 0
    %343 = vmatpush1.bf16.msra.mxu0 0
    %344 = vmatprep.subr.bf16.mxu0 0
    %345 = vmatpush1.bf16.msra.mxu0 0
    %346 = vmatprep.subr.bf16.mxu0 0
    %347 = vmatpush1.bf16.msra.mxu0 0
    %348 = vmatprep.subr.bf16.mxu0 0
    %349 = vmatpush1.bf16.msra.mxu0 0
    %350 = vmatprep.subr.bf16.mxu0 0
    %351 = vmatpush1.bf16.msra.mxu0 0
    %352 = vmatprep.subr.bf16.mxu0 0
    %353 = vmatpush1.bf16.msra.mxu0 %v331
    %354 = vmatprep.subr.bf16.mxu0 0
    %355 = vmatpush1.bf16.msra.mxu0 %v330
    %356 = vmatprep.subr.bf16.mxu0 0
    %357 = vmatpush2.bf16.msra.mxu0 0
    %358 = vmatprep.subr.bf16.mxu0 0
    %359 = vmatpush2.bf16.msra.mxu0 0
    %360 = vmatprep.subr.bf16.mxu0 0
    %361 = vmatpush2.bf16.msra.mxu0 0
    %362 = vmatprep.subr.bf16.mxu0 0
    %363 = vmatpush2.bf16.msra.mxu0 0
    %364 = vmatprep.subr.bf16.mxu0 0
    %365 = vmatpush2.bf16.msra.mxu0 0
    %366 = vmatprep.subr.bf16.mxu0 0
    %367 = vmatpush2.bf16.msra.mxu0 0
    %368 = vmatprep.subr.bf16.mxu0 0
    %369 = vmatpush2.bf16.msra.mxu0 0
    %370 = vmatprep.subr.bf16.mxu0 0
    %371 = vmatpush2.bf16.msra.mxu0 0
    %372 = vmatprep.mubr.bf16.mxu0 0
    %373 = vmatmul.mubr.bf16.gmra.mxu0 %v335
    %v374 = vpop.f32.mrf.mxu0
    %v375 = vadd.f32 %v320, %v374
    %v376 = vpop.f32.mrf.mxu0
    %v377 = vpop.f32.mrf.mxu0
    %v378 = vadd.f32 %v320, %v377
    %v379 = vpop.f32.mrf.mxu0
    %380 = vmatprep.mubr.bf16.mxu0 0
    %381 = vmatmul.mubr.bf16.gmra.mxu0 %v338
    %v382 = vpop.f32.mrf.mxu0
    %v383 = vadd.f32 %v320, %v382
    %v384 = vpop.f32.mrf.mxu0
    %v385 = vpop.f32.mrf.mxu0
    %v386 = vpop.f32.mrf.mxu0
    %387 = vdwg.mxu0
    %v388 = vtanh.pop %v375
    %v389 = vtanh.pop %v378
    %v390 = vtanh.pop %v383
    %v391 = vpack.c.bf16 %v389, %v388
    %v392 = vpack.c.bf16 %v390, %v390
    %v393 = vld [vmem:[#allocation5] sm:$0xf]
    %v395 = vsel %vm182, %v393, 0
    %397 = vmatprep.subr.bf16.mxu0 0
    %398 = vmatpush1.bf16.msra.mxu0 0
    %399 = vmatprep.subr.bf16.mxu0 0
    %400 = vmatpush1.bf16.msra.mxu0 0
    %401 = vmatprep.subr.bf16.mxu0 0
    %402 = vmatpush1.bf16.msra.mxu0 0
    %403 = vmatprep.subr.bf16.mxu0 0
    %404 = vmatpush1.bf16.msra.mxu0 0
    %405 = vmatprep.subr.bf16.mxu0 0
    %406 = vmatpush1.bf16.msra.mxu0 0
    %407 = vmatprep.subr.bf16.mxu0 0
    %408 = vmatpush1.bf16.msra.mxu0 0
    %409 = vmatprep.subr.bf16.mxu0 0
    %410 = vmatpush1.bf16.msra.mxu0 %v243
    %411 = vmatprep.subr.bf16.mxu0 0
    %412 = vmatpush1.bf16.msra.mxu0 %v242
    %413 = vmatprep.subr.bf16.mxu0 0
    %414 = vmatpush2.bf16.msra.mxu0 0
    %415 = vmatprep.subr.bf16.mxu0 0
    %416 = vmatpush2.bf16.msra.mxu0 0
    %417 = vmatprep.subr.bf16.mxu0 0
    %418 = vmatpush2.bf16.msra.mxu0 0
    %419 = vmatprep.subr.bf16.mxu0 0
    %420 = vmatpush2.bf16.msra.mxu0 0
    %421 = vmatprep.subr.bf16.mxu0 0
    %422 = vmatpush2.bf16.msra.mxu0 0
    %423 = vmatprep.subr.bf16.mxu0 0
    %424 = vmatpush2.bf16.msra.mxu0 0
    %425 = vmatprep.subr.bf16.mxu0 0
    %426 = vmatpush2.bf16.msra.mxu0 0
    %427 = vmatprep.subr.bf16.mxu0 0
    %428 = vmatpush2.bf16.msra.mxu0 0
    %429 = vmatprep.mubr.bf16.mxu0 0
    %430 = vmatmul.mubr.bf16.gmra.mxu0 %v395
    %v431 = vpop.f32.mrf.mxu0
    %v432 = vadd.f32 0.0, %v431
    %v433 = vpop.f32.mrf.mxu0
    %v434 = vpop.f32.mrf.mxu0
    %v435 = vpop.f32.mrf.mxu0
    %436 = vdwg.mxu0
    %v437 = vpack.c.bf16 %v432, %v432
    %v439 = vsel %vm182, %v437, 0
    %441 = vmatprep.subr.bf16.mxu0 0
    %442 = vmatpush1.bf16.msra.mxu0 0
    %443 = vmatprep.subr.bf16.mxu0 0
    %444 = vmatpush1.bf16.msra.mxu0 0
    %445 = vmatprep.subr.bf16.mxu0 0
    %446 = vmatpush1.bf16.msra.mxu0 0
    %447 = vmatprep.subr.bf16.mxu0 0
    %448 = vmatpush1.bf16.msra.mxu0 0
    %449 = vmatprep.subr.bf16.mxu0 0
    %450 = vmatpush1.bf16.msra.mxu0 0
    %451 = vmatprep.subr.bf16.mxu0 0
    %452 = vmatpush1.bf16.msra.mxu0 0
    %453 = vmatprep.subr.bf16.mxu0 0
    %454 = vmatpush1.bf16.msra.mxu0 %v331
    %455 = vmatprep.subr.bf16.mxu0 0
    %456 = vmatpush1.bf16.msra.mxu0 %v330
    %457 = vmatprep.subr.bf16.mxu0 0
    %458 = vmatpush2.bf16.msra.mxu0 0
    %459 = vmatprep.subr.bf16.mxu0 0
    %460 = vmatpush2.bf16.msra.mxu0 0
    %461 = vmatprep.subr.bf16.mxu0 0
    %462 = vmatpush2.bf16.msra.mxu0 0
    %463 = vmatprep.subr.bf16.mxu0 0
    %464 = vmatpush2.bf16.msra.mxu0 0
    %465 = vmatprep.subr.bf16.mxu0 0
    %466 = vmatpush2.bf16.msra.mxu0 0
    %467 = vmatprep.subr.bf16.mxu0 0
    %468 = vmatpush2.bf16.msra.mxu0 0
    %469 = vmatprep.subr.bf16.mxu0 0
    %470 = vmatpush2.bf16.msra.mxu0 0
    %471 = vmatprep.subr.bf16.mxu0 0
    %472 = vmatpush2.bf16.msra.mxu0 0
    %473 = vmatprep.mubr.bf16.mxu0 0
    %474 = vmatmul.mubr.bf16.gmra.mxu0 %v439
    %v475 = vpop.f32.mrf.mxu0
    %v476 = vadd.f32 %v320, %v475
    %v477 = vpop.f32.mrf.mxu0
    %v478 = vpop.f32.mrf.mxu0
    %v479 = vpop.f32.mrf.mxu0
    %480 = vdwg.mxu0
    %v481 = vtanh.pop %v476
    %v482 = vld [vmem:[#allocation13] sm:$0xf]
    %v483 = vld [vmem:[#allocation13 + $0x4] sm:$0xf]
    %v484 = vld [vmem:[#allocation13 + $0x8] sm:$0xf]
    %v485 = vld [vmem:[#allocation13 + $0xc] sm:$0xf]
    %v486 = vld [vmem:[#allocation14] sm:$0x1]
    %v488 = vlaneseq
    %v489 = vshrl.u32 %v488, 7
    %v490 = vsub.s32 0, %v489
    %v491 = vrot.slane %v486, %v490
    %v497 = vunpack.c.l.b16 %v482
    %v498 = vunpack.c.l.b16 %v483
    %v499 = vunpack.c.l.b16 %v484
    %v500 = vunpack.c.l.b16 %v485
    %v501 = vpack.c.b16 %v498, %v497
    %v502 = vpack.c.b16 %v500, %v499
    %v506 = vsel %vm182, %v391, 0
    %v509 = vsel %vm182, %v392, 0
    %511 = vmatprep.subr.bf16.mxu0 0
    %512 = vmatpush1.bf16.msra.mxu0 0
    %513 = vmatprep.subr.bf16.mxu0 0
    %514 = vmatpush1.bf16.msra.mxu0 0
    %515 = vmatprep.subr.bf16.mxu0 0
    %516 = vmatpush1.bf16.msra.mxu0 0
    %517 = vmatprep.subr.bf16.mxu0 0
    %518 = vmatpush1.bf16.msra.mxu0 0
    %519 = vmatprep.subr.bf16.mxu0 0
    %520 = vmatpush1.bf16.msra.mxu0 0
    %521 = vmatprep.subr.bf16.mxu0 0
    %522 = vmatpush1.bf16.msra.mxu0 0
    %523 = vmatprep.subr.bf16.mxu0 0
    %524 = vmatpush1.bf16.msra.mxu0 %v502
    %525 = vmatprep.subr.bf16.mxu0 0
    %526 = vmatpush1.bf16.msra.mxu0 %v501
    %527 = vmatprep.subr.bf16.mxu0 0
    %528 = vmatpush2.bf16.msra.mxu0 0
    %529 = vmatprep.subr.bf16.mxu0 0
    %530 = vmatpush2.bf16.msra.mxu0 0
    %531 = vmatprep.subr.bf16.mxu0 0
    %532 = vmatpush2.bf16.msra.mxu0 0
    %533 = vmatprep.subr.bf16.mxu0 0
    %534 = vmatpush2.bf16.msra.mxu0 0
    %535 = vmatprep.subr.bf16.mxu0 0
    %536 = vmatpush2.bf16.msra.mxu0 0
    %537 = vmatprep.subr.bf16.mxu0 0
    %538 = vmatpush2.bf16.msra.mxu0 0
    %539 = vmatprep.subr.bf16.mxu0 0
    %540 = vmatpush2.bf16.msra.mxu0 0
    %541 = vmatprep.subr.bf16.mxu0 0
    %542 = vmatpush2.bf16.msra.mxu0 0
    %543 = vmatprep.mubr.bf16.mxu0 0
    %544 = vmatmul.mubr.bf16.gmra.mxu0 %v506
    %v545 = vpop.f32.mrf.mxu0
    %v546 = vadd.f32 %v491, %v545
    %v547 = vpop.f32.mrf.mxu0
    %v548 = vpop.f32.mrf.mxu0
    %v549 = vadd.f32 %v491, %v548
    %v550 = vpop.f32.mrf.mxu0
    %551 = vmatprep.mubr.bf16.mxu0 0
    %552 = vmatmul.mubr.bf16.gmra.mxu0 %v509
    %v553 = vpop.f32.mrf.mxu0
    %v554 = vadd.f32 %v491, %v553
    %v555 = vpop.f32.mrf.mxu0
    %v556 = vpop.f32.mrf.mxu0
    %v557 = vpop.f32.mrf.mxu0
    %558 = vdwg.mxu0
    %v559 = vtanh.pop %v546
    %v560 = vtanh.pop %v549
    %v561 = vtanh.pop %v554
    %v562 = vpack.c.bf16 %v560, %v559
    %v563 = vpack.c.bf16 %v561, %v561
    %v564 = vld [vmem:[#allocation7] sm:$0xf]
    %vm565 = vcmask 162816
    %v567 = vsel %vm565, %v564, 0
    %vm569 = vcmask 1041408
    %v571 = vsel %vm569, %v563, 0
    %573 = vmatprep.subr.bf16.mxu0 0
    %574 = vmatpush1.bf16.msra.mxu0 0
    %575 = vmatprep.subr.bf16.mxu0 0
    %576 = vmatpush1.bf16.msra.mxu0 0
    %577 = vmatprep.subr.bf16.mxu0 0
    %578 = vmatpush1.bf16.msra.mxu0 0
    %579 = vmatprep.subr.bf16.mxu0 0
    %580 = vmatpush1.bf16.msra.mxu0 0
    %581 = vmatprep.subr.bf16.mxu0 0
    %582 = vmatpush1.bf16.msra.mxu0 0
    %583 = vmatprep.subr.bf16.mxu0 0
    %584 = vmatpush1.bf16.msra.mxu0 0
    %585 = vmatprep.subr.bf16.mxu0 0
    %586 = vmatpush1.bf16.msra.mxu0 %v571
    %587 = vmatprep.subr.bf16.mxu0 0
    %588 = vmatpush1.bf16.msra.mxu0 %v562
    %589 = vmatprep.subr.bf16.mxu0 0
    %590 = vmatpush2.bf16.msra.mxu0 0
    %591 = vmatprep.subr.bf16.mxu0 0
    %592 = vmatpush2.bf16.msra.mxu0 0
    %593 = vmatprep.subr.bf16.mxu0 0
    %594 = vmatpush2.bf16.msra.mxu0 0
    %595 = vmatprep.subr.bf16.mxu0 0
    %596 = vmatpush2.bf16.msra.mxu0 0
    %597 = vmatprep.subr.bf16.mxu0 0
    %598 = vmatpush2.bf16.msra.mxu0 0
    %599 = vmatprep.subr.bf16.mxu0 0
    %600 = vmatpush2.bf16.msra.mxu0 0
    %601 = vmatprep.subr.bf16.mxu0 0
    %602 = vmatpush2.bf16.msra.mxu0 0
    %603 = vmatprep.subr.bf16.mxu0 0
    %604 = vmatpush2.bf16.msra.mxu0 0
    %605 = vmatprep.mubr.bf16.mxu0 0
    %606 = vmatmul.mubr.bf16.gmra.mxu0 %v567
    %v607 = vpop.f32.mrf.mxu0
    %v608 = vadd.f32 0.0, %v607
    %v609 = vpop.f32.mrf.mxu0
    %v610 = vpop.f32.mrf.mxu0
    %v611 = vpop.f32.mrf.mxu0
    %612 = vdwg.mxu0
    %v613 = vpack.c.bf16 %v608, %v608
    %v614 = vld [vmem:[%s10] sm:$0xf]
    %v615 = vld [vmem:[%s10 + $0x4] sm:$0xf]
    %v616 = vld [vmem:[%s10 + $0x8] sm:$0xf]
    %v617 = vld [vmem:[%s10 + $0xc] sm:$0xf]
    %v618 = vld [vmem:[%s11] sm:$0x1]
    %v620 = vlaneseq
    %v621 = vshrl.u32 %v620, 7
    %v622 = vsub.s32 0, %v621
    %v623 = vrot.slane %v618, %v622
    %v629 = vunpack.c.l.b16 %v614
    %v630 = vunpack.c.l.b16 %v615
    %v631 = vunpack.c.l.b16 %v616
    %v632 = vunpack.c.l.b16 %v617
    %v633 = vpack.c.b16 %v630, %v629
    %v634 = vpack.c.b16 %v632, %v631
    %v638 = vsel %vm182, %v613, 0
    %640 = vmatprep.subr.bf16.mxu0 0
    %641 = vmatpush1.bf16.msra.mxu0 0
    %642 = vmatprep.subr.bf16.mxu0 0
    %643 = vmatpush1.bf16.msra.mxu0 0
    %644 = vmatprep.subr.bf16.mxu0 0
    %645 = vmatpush1.bf16.msra.mxu0 0
    %646 = vmatprep.subr.bf16.mxu0 0
    %647 = vmatpush1.bf16.msra.mxu0 0
    %648 = vmatprep.subr.bf16.mxu0 0
    %649 = vmatpush1.bf16.msra.mxu0 0
    %650 = vmatprep.subr.bf16.mxu0 0
    %651 = vmatpush1.bf16.msra.mxu0 0
    %652 = vmatprep.subr.bf16.mxu0 0
    %653 = vmatpush1.bf16.msra.mxu0 %v634
    %654 = vmatprep.subr.bf16.mxu0 0
    %655 = vmatpush1.bf16.msra.mxu0 %v633
    %656 = vmatprep.subr.bf16.mxu0 0
    %657 = vmatpush2.bf16.msra.mxu0 0
    %658 = vmatprep.subr.bf16.mxu0 0
    %659 = vmatpush2.bf16.msra.mxu0 0
    %660 = vmatprep.subr.bf16.mxu0 0
    %661 = vmatpush2.bf16.msra.mxu0 0
    %662 = vmatprep.subr.bf16.mxu0 0
    %663 = vmatpush2.bf16.msra.mxu0 0
    %664 = vmatprep.subr.bf16.mxu0 0
    %665 = vmatpush2.bf16.msra.mxu0 0
    %666 = vmatprep.subr.bf16.mxu0 0
    %667 = vmatpush2.bf16.msra.mxu0 0
    %668 = vmatprep.subr.bf16.mxu0 0
    %669 = vmatpush2.bf16.msra.mxu0 0
    %670 = vmatprep.subr.bf16.mxu0 0
    %671 = vmatpush2.bf16.msra.mxu0 0
    %672 = vmatprep.mubr.bf16.mxu0 0
    %673 = vmatmul.mubr.bf16.gmra.mxu0 %v638
    %v674 = vpop.f32.mrf.mxu0
    %v675 = vadd.f32 %v623, %v674
    %v676 = vpop.f32.mrf.mxu0
    %v677 = vpop.f32.mrf.mxu0
    %v678 = vpop.f32.mrf.mxu0
    %679 = vdwg.mxu0
    %v680 = vtanh.pop %v675
    %vm681 = vcmask 130048
    %682 = vst.msk [vmem:[#allocation16] sm:$0xff] %vm681, %v680
    %683 = vst.msk [vmem:[#allocation17] sm:$0xff] %vm182, %v481
    // Predicated region
    $region82: #{tpu_custom_call.1} parent=1 // pred_check
      _
    $region83: #{tpu_custom_call.1} parent=1 // pred_check_branch
      %685 = sbr.rel (0) target = $region85
    $region84: #{tpu_custom_call.1} parent=1 // pred_region
      %s687 = ssub.s32 128, 128
      %688 = vsyncadd [#allocation4], %s687
      %s690 = sshll.u32 [#allocation16], 4
      %s691 = int_to_ptr.vmem [resolvable:$true] %s690
      %693 = dma.vmem_to_hbm [thread:$0]  %s691, 128, %s12, [#allocation4]
    $region85: #{tpu_custom_call.1} parent=1 // pred_fallthru
      _
    // Predicated region
    $region86: #{tpu_custom_call.1} parent=1 // pred_check
      _
    $region87: #{tpu_custom_call.1} parent=1 // pred_check_branch
      %695 = sbr.rel (0) target = $region89
    $region88: #{tpu_custom_call.1} parent=1 // pred_region
      %s697 = ssub.s32 128, 128
      %698 = vsyncadd [#allocation18], %s697
      %s700 = sshll.u32 [#allocation17], 4
      %s701 = int_to_ptr.vmem [resolvable:$true] %s700
      %703 = dma.vmem_to_hbm [thread:$0]  %s701, 128, %s13, [#allocation18]
    $region89: #{tpu_custom_call.1} parent=1 // pred_fallthru
      _
    // Predicated region
    $region90: #{tpu_custom_call.1} parent=1 // pred_check
      _
    $region91: #{tpu_custom_call.1} parent=1 // pred_check_branch
      %705 = sbr.rel (0) target = $region93
    $region92: #{tpu_custom_call.1} parent=1 // pred_region
      %706 = dma.done [#allocation4], 128
    $region93: #{tpu_custom_call.1} parent=1 // pred_fallthru
      _
    // Predicated region
    $region94: #{tpu_custom_call.1} parent=1 // pred_check
      _
    $region95: #{tpu_custom_call.1} parent=1 // pred_check_branch
      %708 = sbr.rel (0) target = $region97
    $region96: #{tpu_custom_call.1} parent=1 // pred_region
      %709 = dma.done [#allocation18], 128
    $region97: #{tpu_custom_call.1} parent=1 // pred_fallthru
      _
    %710 = vsyncpa [#allocation3], 1
    %711 = vsyncpa [#allocation6], 1
    %712 = vsyncpa [#allocation9], 1
    %713 = vsyncpa [#allocation12], 1
    %714 = vsyncpa [#allocation15], 1
    %715 = vsyncpa [#allocation4], 1
    %716 = vsyncpa [#allocation18], 1

</llo_original>
